<compile_context>
chip_gen: v7x
topology: tpu7x:2x2x1
jax: 0.10.0
libtpu: 0.0.40
codegen_flags: <defaults>
</compile_context>

<pallas_src>
import jax
import jax.numpy as jnp
from jax.experimental import pallas as pl
from jax.experimental.pallas import tpu as pltpu


def _classification_head_kernel(x_ref, w1_ref, b1_ref, w2_ref, b2_ref, out_ref):
    # x_ref: (tb, H) slab of features[0] (f32).  Weights arrive in the MXU compute
    # dtype chosen at prepare_params() time; biases / accumulation / tanh stay f32.
    x = x_ref[...]
    h = jnp.dot(x.astype(w1_ref.dtype), w1_ref[...],
                preferred_element_type=jnp.float32) + b1_ref[...]
    h = jnp.tanh(h)
    logits = jnp.dot(h.astype(w2_ref.dtype), w2_ref[...],
                     preferred_element_type=jnp.float32) + b2_ref[...]
    out_ref[...] = logits.astype(out_ref.dtype)


def _round_up(x, m):
    return ((x + m - 1) // m) * m


def _pick_batch_tile(batch, block_b, align):
    """Batch tile: sublane-aligned, fat (>=128 rows once B is large), and yielding at
    least 2 grid steps for B > 128 so both v7x TensorCores get work."""
    if batch <= 128:
        # Small batch: one aligned tile.  Don't let the alignment exceed the batch
        # itself (keeps the tile <= array dim for tiny batches).
        a = align if batch >= align else 8
        return _round_up(batch, a)
    # B > 128: keep tiles multiples of 128 and ensure >= 2 grid steps.
    return max(128, min(block_b, _round_up(pl.cdiv(batch, 2), 128)))


def _vmem_limit_bytes(tb, H, Lp, weight_bytes, weight_bufs):
    """Accurate VMEM budget: resident weights x buffer_count + double-buffered
    x/out tiles + slack.  Clamped to a sane envelope."""
    x_io = 2 * tb * H * 4        # double-buffered f32 input slab
    out_io = 2 * tb * Lp * 4     # double-buffered f32 output tile
    total = weight_bufs * weight_bytes + x_io + out_io + 2 * 1024 * 1024
    return int(min(max(total, 8 * 1024 * 1024), 128 * 1024 * 1024))


def prepare_params(w_dense, b_dense, w_out, b_out, *, compute_dtype=jnp.float32):
    """One-time (model-load) parameter preparation.

    Casts weights to the MXU compute dtype (f32 exact; bf16 recommended on
    v5e/v6e/v7x for the weight-DMA-bound regime) and zero-pads num_labels up to a
    lane-dense multiple of 128 so the kernel's store path is unmasked.  Doing this
    once avoids re-reading/re-writing the dominant (H,H) weight on every call.
    """
    H = w_dense.shape[0]
    L = w_out.shape[1]
    Lp = _round_up(max(L, 1), 128)
    return {
        "w1": w_dense.astype(compute_dtype),                                  # (H, H)
        "b1": b_dense.reshape(1, H).astype(jnp.float32),                      # (1, H)
        "w2": jnp.pad(w_out, ((0, 0), (0, Lp - L))).astype(compute_dtype),    # (H, Lp)
        "b2": jnp.pad(b_out, (0, Lp - L)).reshape(1, Lp).astype(jnp.float32), # (1, Lp)
        "num_labels": L,
    }


def classification_head_forward(features, params, *, block_b=256):
    """features: (S, B, H); only features[0] is used.  params from prepare_params().
    Returns logits (B, num_labels) in float32."""
    S, B, H = features.shape
    w1, b1, w2, b2 = params["w1"], params["b1"], params["w2"], params["b2"]
    L = params["num_labels"]
    Lp = w2.shape[1]
    compute_dtype = w1.dtype

    # Dtype-aware sublane alignment for the batch tile (8 for f32, 16 for bf16).
    align = 16 if compute_dtype == jnp.bfloat16 else 8
    tb = _pick_batch_tile(B, block_b, align)
    grid_b = pl.cdiv(B, tb)
    Bp = grid_b * tb  # padded output rows; extra rows (garbage inputs) sliced off.

    # Resident weight footprint -> single-buffer the constant-index weight blocks
    # once they are large (their block never changes; double-buffering is waste).
    weight_bytes = (H * H + H * Lp) * jnp.dtype(compute_dtype).itemsize + (H + Lp) * 4
    single_buffer_weights = weight_bytes > 4 * 1024 * 1024
    weight_mode = pl.Buffered(buffer_count=1) if single_buffer_weights else None
    weight_bufs = 1 if single_buffer_weights else 2

    logits_p = pl.pallas_call(
        _classification_head_kernel,
        out_shape=jax.ShapeDtypeStruct((Bp, Lp), jnp.float32),
        grid_spec=pltpu.PrefetchScalarGridSpec(
            num_scalar_prefetch=0,
            grid=(grid_b,),
            in_specs=[
                # Only timestep 0 of features is ever DMA'd (leading dim squeezed).
                pl.BlockSpec((pl.Squeezed(), tb, H), lambda i: (0, i, 0)),
                # Weights/biases: constant block index -> resident across the grid.
                pl.BlockSpec((H, H), lambda i: (0, 0), pipeline_mode=weight_mode),
                pl.BlockSpec((1, H), lambda i: (0, 0), pipeline_mode=weight_mode),
                pl.BlockSpec((H, Lp), lambda i: (0, 0), pipeline_mode=weight_mode),
                pl.BlockSpec((1, Lp), lambda i: (0, 0), pipeline_mode=weight_mode),
            ],
            out_specs=pl.BlockSpec((tb, Lp), lambda i: (i, 0)),
        ),
        compiler_params=pltpu.CompilerParams(
            dimension_semantics=("parallel",),
            vmem_limit_bytes=_vmem_limit_bytes(tb, H, Lp, weight_bytes, weight_bufs),
        ),
    )(features, w1, b1, w2, b2)

    return logits_p[:B, :L]


def init_params(key, hidden_size, num_labels):
    """Deterministic nn.Linear-style init: U(-1/sqrt(fan_in), 1/sqrt(fan_in)).
    Weights stored (in_features, out_features) so the kernel does x @ W + b."""
    k1, k2, k3, k4 = jax.random.split(key, 4)
    bound = 1.0 / jnp.sqrt(hidden_size)
    w_dense = jax.random.uniform(k1, (hidden_size, hidden_size), jnp.float32,
                                 -bound, bound)
    b_dense = jax.random.uniform(k2, (hidden_size,), jnp.float32, -bound, bound)
    w_out = jax.random.uniform(k3, (hidden_size, num_labels), jnp.float32,
                               -bound, bound)
    b_out = jax.random.uniform(k4, (num_labels,), jnp.float32, -bound, bound)
    return w_dense, b_dense, w_out, b_out


def reference_forward(features, w_dense, b_dense, w_out, b_out):
    x = features[0, :, :]
    x = jnp.tanh(x @ w_dense + b_dense)
    return x @ w_out + b_out


if __name__ == "__main__":
    # Small shapes consistent with the module: seq=8, batch=8, hidden=32, labels=2.
    S, B, H, L = 8, 8, 32, 2
    key = jax.random.PRNGKey(0)
    k_feat, k_param = jax.random.split(key)

    features = jax.random.normal(k_feat, (S, B, H), dtype=jnp.float32)
    w_dense, b_dense, w_out, b_out = init_params(k_param, H, L)

    ref = reference_forward(features, w_dense, b_dense, w_out, b_out)

    # f32 path (exact module semantics); params prepared ONCE at "model load".
    params_f32 = prepare_params(w_dense, b_dense, w_out, b_out)
    logits = jax.block_until_ready(classification_head_forward(features, params_f32))
    assert logits.shape == (B, L)
    assert jnp.allclose(logits, ref, atol=1e-5, rtol=1e-5), (
        f"f32 max abs diff {jnp.max(jnp.abs(logits - ref))}")

    # bf16-MXU weights (recommended on v5e/v6e/v7x at production H); looser tolerance.
    params_bf16 = prepare_params(w_dense, b_dense, w_out, b_out,
                                 compute_dtype=jnp.bfloat16)
    logits_bf16 = jax.block_until_ready(
        classification_head_forward(features, params_bf16))
    assert logits_bf16.shape == (B, L)
    assert jnp.allclose(logits_bf16, ref, atol=3e-2, rtol=3e-2), (
        f"bf16 max abs diff {jnp.max(jnp.abs(logits_bf16 - ref))}")

    print("KERNEL_OK")
</pallas_src>

<mosaic_0001>
module attributes {stable_mosaic.version = 11 : i64} {
  func.func @_classification_head_kernel(%arg0: i32, %arg1: memref<1x8x32xf32, #tpu.memory_space<vmem>>, %arg2: memref<32x32xf32, #tpu.memory_space<vmem>>, %arg3: memref<1x32xf32, #tpu.memory_space<vmem>>, %arg4: memref<32x128xf32, #tpu.memory_space<vmem>>, %arg5: memref<1x128xf32, #tpu.memory_space<vmem>>, %arg6: memref<8x128xf32, #tpu.memory_space<vmem>>) attributes {dimension_semantics = [#tpu.dimension_semantics<parallel>], iteration_bounds = array<i64: 1>, scalar_prefetch = 0 : i64, scratch_operands = 0 : i64, tpu.core_type = #tpu.core_type<tc>, window_params = [{transform_indices = @transform_0, window_bounds = array<i64: 1, 8, 32>}, {pipeline_mode = #tpu.pipeline_mode<synchronous>, transform_indices = @transform_1, window_bounds = array<i64: 32, 32>}, {pipeline_mode = #tpu.pipeline_mode<synchronous>, transform_indices = @transform_2, window_bounds = array<i64: 1, 32>}, {pipeline_mode = #tpu.pipeline_mode<synchronous>, transform_indices = @transform_3, window_bounds = array<i64: 32, 128>}, {pipeline_mode = #tpu.pipeline_mode<synchronous>, transform_indices = @transform_4, window_bounds = array<i64: 1, 128>}, {transform_indices = @transform_5, window_bounds = array<i64: 8, 128>}]} {
    %c0 = arith.constant 0 : index
    %c0_0 = arith.constant 0 : index
    %c0_1 = arith.constant 0 : index
    %0 = vector.load %arg1[%c0, %c0_0, %c0_1] : memref<1x8x32xf32, #tpu.memory_space<vmem>>, vector<1x8x32xf32>
    %1 = vector.shape_cast %0 : vector<1x8x32xf32> to vector<8x32xf32>
    %c0_2 = arith.constant 0 : index
    %c0_3 = arith.constant 0 : index
    %2 = vector.load %arg2[%c0_2, %c0_3] : memref<32x32xf32, #tpu.memory_space<vmem>>, vector<32x32xf32>
    %cst = arith.constant dense<0.000000e+00> : vector<8x32xf32>
    %3 = tpu.matmul %1, %2, %cst {dimension_numbers = #tpu.dot_dimension_numbers<[1], [0], [0], [1], [0, 0, 1, 1], [], []>} : vector<8x32xf32>, vector<32x32xf32>, vector<8x32xf32> -> vector<8x32xf32>
    %c0_4 = arith.constant 0 : index
    %c0_5 = arith.constant 0 : index
    %4 = vector.load %arg3[%c0_4, %c0_5] : memref<1x32xf32, #tpu.memory_space<vmem>>, vector<1x32xf32>
    %5 = vector.broadcast %4 : vector<1x32xf32> to vector<8x32xf32>
    %6 = arith.addf %3, %5 : vector<8x32xf32>
    %7 = math.tanh %6 : vector<8x32xf32>
    %c0_6 = arith.constant 0 : index
    %c0_7 = arith.constant 0 : index
    %8 = vector.load %arg4[%c0_6, %c0_7] : memref<32x128xf32, #tpu.memory_space<vmem>>, vector<32x128xf32>
    %cst_8 = arith.constant dense<0.000000e+00> : vector<8x128xf32>
    %9 = tpu.matmul %7, %8, %cst_8 {dimension_numbers = #tpu.dot_dimension_numbers<[1], [0], [0], [1], [0, 0, 1, 1], [], []>} : vector<8x32xf32>, vector<32x128xf32>, vector<8x128xf32> -> vector<8x128xf32>
    %c0_9 = arith.constant 0 : index
    %c0_10 = arith.constant 0 : index
    %10 = vector.load %arg5[%c0_9, %c0_10] : memref<1x128xf32, #tpu.memory_space<vmem>>, vector<1x128xf32>
    %11 = vector.broadcast %10 : vector<1x128xf32> to vector<8x128xf32>
    %12 = arith.addf %9, %11 : vector<8x128xf32>
    %c0_11 = arith.constant 0 : index
    %c0_12 = arith.constant 0 : index
    %13 = vector.load %arg6[%c0_11, %c0_12] : memref<8x128xf32, #tpu.memory_space<vmem>>, vector<8x128xf32>
    tpu.vector_store %arg6[%c0_11, %c0_12], %12 {strides = array<i32>} : memref<8x128xf32, #tpu.memory_space<vmem>>, vector<8x128xf32>,
    return
  }
  func.func @transform_0(%arg0: i32) -> (i32, i32, i32) {
    %c0_i32 = arith.constant 0 : i32
    %c0_i32_0 = arith.constant 0 : i32
    %c0_i32_1 = arith.constant 0 : i32
    return %c0_i32, %arg0, %c0_i32_0 : i32, i32, i32
  }
  func.func @transform_1(%arg0: i32) -> (i32, i32) {
    %c0_i32 = arith.constant 0 : i32
    %c0_i32_0 = arith.constant 0 : i32
    %c0_i32_1 = arith.constant 0 : i32
    return %c0_i32, %c0_i32_0 : i32, i32
  }
  func.func @transform_2(%arg0: i32) -> (i32, i32) {
    %c0_i32 = arith.constant 0 : i32
    %c0_i32_0 = arith.constant 0 : i32
    %c0_i32_1 = arith.constant 0 : i32
    return %c0_i32, %c0_i32_0 : i32, i32
  }
  func.func @transform_3(%arg0: i32) -> (i32, i32) {
    %c0_i32 = arith.constant 0 : i32
    %c0_i32_0 = arith.constant 0 : i32
    %c0_i32_1 = arith.constant 0 : i32
    return %c0_i32, %c0_i32_0 : i32, i32
  }
  func.func @transform_4(%arg0: i32) -> (i32, i32) {
    %c0_i32 = arith.constant 0 : i32
    %c0_i32_0 = arith.constant 0 : i32
    %c0_i32_1 = arith.constant 0 : i32
    return %c0_i32, %c0_i32_0 : i32, i32
  }
  func.func @transform_5(%arg0: i32) -> (i32, i32) {
    %c0_i32 = arith.constant 0 : i32
    %c0_i32_0 = arith.constant 0 : i32
    return %arg0, %c0_i32 : i32, i32
  }
}

</mosaic_0001>

<llo_original>
// kernel: tpu_custom_call.1
$region0: #{tpu_custom_call.1}
  #allocation0 [shape = 'u32[]', space=smem, size = 0x4, offset = 0x4, fixed_abs, tag = 'smem constant byte address 0x4 - core index']
  #allocation1 [shape = 'u32[144,128]{1,0:T(1,128)}', space=vmem, size = 0x12000, scoped, tag = 'internal scratch']
  %s0 = inlined_call_operand.hbm [shape: f32[8,8,32], index: 0, kind: input, shape index: {}]
  %s1 = inlined_call_operand.hbm [shape: f32[32,32], index: 1, kind: input, shape index: {}]
  %s2 = inlined_call_operand.vmem [shape: f32[1,32], index: 2, kind: input, shape index: {}]
  %s3 = inlined_call_operand.hbm [shape: f32[32,128], index: 3, kind: input, shape index: {}]
  %s4 = inlined_call_operand.vmem [shape: f32[1,128], index: 4, kind: input, shape index: {}]
  %s5 = inlined_call_operand.hbm [shape: f32[8,128], index: 5, kind: output, shape index: {}]
  %s6 = sld [smem:[#allocation0]]
  $region42: #{tpu_custom_call.1} parent=0
    _
  %s8 = ssub.s32 1, %s6
  %s9 = scalar_select 0, %s8, %s6
  $region1: #{tpu_custom_call.1} parent=0
    #allocation2 [shape = 'u8[4096]{0}', space=vmem, size = 0x1000, scoped, tag = 'input window, operand 0, single buffered']
    #allocation3 [shape = 's32[1]{0}', space=sflag, size = 0x4, scoped, tag = 'scoped memory for tpu_custom_call.1']
    #allocation4 [shape = 's32[1]{0}', space=sflag, size = 0x4, scoped, tag = 'scoped memory for tpu_custom_call.1']
    #allocation5 [shape = 'u8[16384]{0}', space=vmem, size = 0x4000, scoped, tag = 'input window, operand 1, single buffered']
    #allocation6 [shape = 's32[1]{0}', space=sflag, size = 0x4, scoped, tag = 'scoped memory for tpu_custom_call.1']
    #allocation7 [shape = 'u8[16384]{0}', space=vmem, size = 0x4000, scoped, tag = 'input window, operand 3, single buffered']
    #allocation8 [shape = 'u8[4096]{0}', space=vmem, size = 0x1000, scoped, tag = 'output window, operand 0, single buffered']
    %10 = vsyncpa [#allocation3], 0
    %11 = vsyncpa [#allocation6], 0
    %12 = vsyncpa [#allocation4], 0
    // Predicated region
    $region2: #{tpu_custom_call.1} parent=1 // pred_check
      _
    $region3: #{tpu_custom_call.1} parent=1 // pred_check_branch
      %14 = sbr.rel (0) target = $region5
    $region4: #{tpu_custom_call.1} parent=1 // pred_region
      %s16 = ssub.s32 128, 128
      %17 = vsyncadd [#allocation3], %s16
      %s19 = sshll.u32 [#allocation2], 4
      %s20 = int_to_ptr.vmem [resolvable:$true] %s19
      %22 = dma.hbm_to_vmem [thread:$0]  %s0, 128, %s20, [#allocation3]
    $region5: #{tpu_custom_call.1} parent=1 // pred_fallthru
      _
    // Predicated region
    $region6: #{tpu_custom_call.1} parent=1 // pred_check
      _
    $region7: #{tpu_custom_call.1} parent=1 // pred_check_branch
      %24 = sbr.rel (0) target = $region9
    $region8: #{tpu_custom_call.1} parent=1 // pred_region
      %s26 = ssub.s32 512, 512
      %27 = vsyncadd [#allocation6], %s26
      %s28 = sshll.u32 [#allocation5], 4
      %s29 = int_to_ptr.vmem [resolvable:$true] %s28
      %34 = dma.hbm_to_vmem [thread:$0]  %s1, 512, %s29, [#allocation6], 128, 128, 8
    $region9: #{tpu_custom_call.1} parent=1 // pred_fallthru
      _
    // Predicated region
    $region10: #{tpu_custom_call.1} parent=1 // pred_check
      _
    $region11: #{tpu_custom_call.1} parent=1 // pred_check_branch
      %36 = sbr.rel (0) target = $region13
    $region12: #{tpu_custom_call.1} parent=1 // pred_region
      _
    $region13: #{tpu_custom_call.1} parent=1 // pred_fallthru
      _
    // Predicated region
    $region14: #{tpu_custom_call.1} parent=1 // pred_check
      _
    $region15: #{tpu_custom_call.1} parent=1 // pred_check_branch
      %38 = sbr.rel (0) target = $region17
    $region16: #{tpu_custom_call.1} parent=1 // pred_region
      %s40 = ssub.s32 512, 512
      %41 = vsyncadd [#allocation6], %s40
      %s42 = sshll.u32 [#allocation7], 4
      %s43 = int_to_ptr.vmem [resolvable:$true] %s42
      %48 = dma.hbm_to_vmem [thread:$0]  %s3, 512, %s43, [#allocation6], 128, 128, 8
    $region17: #{tpu_custom_call.1} parent=1 // pred_fallthru
      _
    // Predicated region
    $region18: #{tpu_custom_call.1} parent=1 // pred_check
      _
    $region19: #{tpu_custom_call.1} parent=1 // pred_check_branch
      %50 = sbr.rel (0) target = $region21
    $region20: #{tpu_custom_call.1} parent=1 // pred_region
      _
    $region21: #{tpu_custom_call.1} parent=1 // pred_fallthru
      _
    // Predicated region
    $region22: #{tpu_custom_call.1} parent=1 // pred_check
      _
    $region23: #{tpu_custom_call.1} parent=1 // pred_check_branch
      %52 = sbr.rel (0) target = $region25
    $region24: #{tpu_custom_call.1} parent=1 // pred_region
      %53 = dma.done [#allocation3], 128
    $region25: #{tpu_custom_call.1} parent=1 // pred_fallthru
      _
    // Predicated region
    $region26: #{tpu_custom_call.1} parent=1 // pred_check
      _
    $region27: #{tpu_custom_call.1} parent=1 // pred_check_branch
      %55 = sbr.rel (0) target = $region29
    $region28: #{tpu_custom_call.1} parent=1 // pred_region
      %56 = dma.done [#allocation6], 512
    $region29: #{tpu_custom_call.1} parent=1 // pred_fallthru
      _
    // Predicated region
    $region30: #{tpu_custom_call.1} parent=1 // pred_check
      _
    $region31: #{tpu_custom_call.1} parent=1 // pred_check_branch
      %58 = sbr.rel (0) target = $region33
    $region32: #{tpu_custom_call.1} parent=1 // pred_region
      %59 = dma.done [#allocation6], 512
    $region33: #{tpu_custom_call.1} parent=1 // pred_fallthru
      _
    %v60 = vld [vmem:[#allocation2] sm:$0xff]
    %v61 = vld [vmem:[#allocation5] sm:$0xff]
    %v62 = vld [vmem:[#allocation5 + $0x8] sm:$0xff]
    %v63 = vld [vmem:[#allocation5 + $0x10] sm:$0xff]
    %v64 = vld [vmem:[#allocation5 + $0x18] sm:$0xff]
    %v65 = vld [vmem:[%s2] sm:$0x1]
    %v67 = vlaneseq
    %v68 = vshrl.u32 %v67, 7
    %v69 = vsub.s32 0, %v68
    %v70 = vrot.slane %v65, %v69
    %vm72 = vcmask 261120
    %v74 = vsel %vm72, %v60, 0
    %76 = vmatprep.subr.mxu0 0.0
    %77 = vmatpush1.msra.mxu0 %v61
    %78 = vmatprep.subr.mxu0 0.0
    %79 = vmatpush1.msra.mxu0 %v62
    %80 = vmatprep.subr.mxu0 0.0
    %81 = vmatpush1.msra.mxu0 %v63
    %82 = vmatprep.subr.mxu0 0.0
    %83 = vmatpush1.msra.mxu0 %v64
    %84 = vmatprep.subr.mxu0 0.0
    %85 = vmatpush1.msra.mxu0 0.0
    %86 = vmatprep.subr.mxu0 0.0
    %87 = vmatpush1.msra.mxu0 0.0
    %88 = vmatprep.subr.mxu0 0.0
    %89 = vmatpush1.msra.mxu0 0.0
    %90 = vmatprep.subr.mxu0 0.0
    %91 = vmatpush1.msra.mxu0 0.0
    %92 = vmatprep.subr.mxu0 0.0
    %93 = vmatpush1.msra.mxu0 0.0
    %94 = vmatprep.subr.mxu0 0.0
    %95 = vmatpush1.msra.mxu0 0.0
    %96 = vmatprep.subr.mxu0 0.0
    %97 = vmatpush1.msra.mxu0 0.0
    %98 = vmatprep.subr.mxu0 0.0
    %99 = vmatpush1.msra.mxu0 0.0
    %100 = vmatprep.subr.mxu0 0.0
    %101 = vmatpush1.msra.mxu0 0.0
    %102 = vmatprep.subr.mxu0 0.0
    %103 = vmatpush1.msra.mxu0 0.0
    %104 = vmatprep.subr.mxu0 0.0
    %105 = vmatpush1.msra.mxu0 0.0
    %106 = vmatprep.subr.mxu0 0.0
    %107 = vmatpush1.msra.mxu0 0.0
    %108 = vmatprep.subr.mxu0 0.0
    %109 = vmatpush1.msra.mxu0 0.0
    %110 = vmatprep.subr.mxu0 0.0
    %111 = vmatpush1.msra.mxu0 0.0
    %112 = vmatprep.subr.mxu0 0.0
    %113 = vmatpush1.msra.mxu0 0.0
    %114 = vmatprep.subr.mxu0 0.0
    %115 = vmatpush1.msra.mxu0 0.0
    %116 = vmatprep.subr.mxu0 0.0
    %117 = vmatpush1.msra.mxu0 0.0
    %118 = vmatprep.subr.mxu0 0.0
    %119 = vmatpush1.msra.mxu0 0.0
    %120 = vmatprep.subr.mxu0 0.0
    %121 = vmatpush1.msra.mxu0 0.0
    %122 = vmatprep.subr.mxu0 0.0
    %123 = vmatpush1.msra.mxu0 0.0
    %124 = vmatprep.subr.mxu0 0.0
    %125 = vmatpush1.msra.mxu0 0.0
    %126 = vmatprep.subr.mxu0 0.0
    %127 = vmatpush1.msra.mxu0 0.0
    %128 = vmatprep.subr.mxu0 0.0
    %129 = vmatpush1.msra.mxu0 0.0
    %130 = vmatprep.subr.mxu0 0.0
    %131 = vmatpush1.msra.mxu0 0.0
    %132 = vmatprep.subr.mxu0 0.0
    %133 = vmatpush1.msra.mxu0 0.0
    %134 = vmatprep.subr.mxu0 0.0
    %135 = vmatpush1.msra.mxu0 0.0
    %136 = vmatprep.subr.mxu0 0.0
    %137 = vmatpush1.msra.mxu0 0.0
    %138 = vmatprep.subr.mxu0 0.0
    %139 = vmatpush1.msra.mxu0 0.0
    %140 = vmatprep.mubr.f32.mxu0 0.0
    %141 = vmatmul.mubr.f32.gmra.mrb[0].mxu0 %v74
    %v142 = vpop.f32.mrb[0].mxu0
    %v143 = vadd.f32 %v70, %v142
    %v144 = vpop.f32.mrb[0].mxu0
    %145 = vdwg.mxu0
    %v146 = vtanh.pop %v143
    %v147 = vld [vmem:[#allocation7] sm:$0xff]
    %v148 = vld [vmem:[#allocation7 + $0x8] sm:$0xff]
    %v149 = vld [vmem:[#allocation7 + $0x10] sm:$0xff]
    %v150 = vld [vmem:[#allocation7 + $0x18] sm:$0xff]
    %v151 = vld [vmem:[%s4] sm:$0x1]
    %v153 = vlaneseq
    %v154 = vshrl.u32 %v153, 7
    %v155 = vsub.s32 0, %v154
    %v156 = vrot.slane %v151, %v155
    %v159 = vsel %vm72, %v146, 0
    %161 = vmatprep.subr.mxu0 0.0
    %162 = vmatpush1.msra.mxu0 %v147
    %163 = vmatprep.subr.mxu0 0.0
    %164 = vmatpush1.msra.mxu0 %v148
    %165 = vmatprep.subr.mxu0 0.0
    %166 = vmatpush1.msra.mxu0 %v149
    %167 = vmatprep.subr.mxu0 0.0
    %168 = vmatpush1.msra.mxu0 %v150
    %169 = vmatprep.subr.mxu0 0.0
    %170 = vmatpush1.msra.mxu0 0.0
    %171 = vmatprep.subr.mxu0 0.0
    %172 = vmatpush1.msra.mxu0 0.0
    %173 = vmatprep.subr.mxu0 0.0
    %174 = vmatpush1.msra.mxu0 0.0
    %175 = vmatprep.subr.mxu0 0.0
    %176 = vmatpush1.msra.mxu0 0.0
    %177 = vmatprep.subr.mxu0 0.0
    %178 = vmatpush1.msra.mxu0 0.0
    %179 = vmatprep.subr.mxu0 0.0
    %180 = vmatpush1.msra.mxu0 0.0
    %181 = vmatprep.subr.mxu0 0.0
    %182 = vmatpush1.msra.mxu0 0.0
    %183 = vmatprep.subr.mxu0 0.0
    %184 = vmatpush1.msra.mxu0 0.0
    %185 = vmatprep.subr.mxu0 0.0
    %186 = vmatpush1.msra.mxu0 0.0
    %187 = vmatprep.subr.mxu0 0.0
    %188 = vmatpush1.msra.mxu0 0.0
    %189 = vmatprep.subr.mxu0 0.0
    %190 = vmatpush1.msra.mxu0 0.0
    %191 = vmatprep.subr.mxu0 0.0
    %192 = vmatpush1.msra.mxu0 0.0
    %193 = vmatprep.subr.mxu0 0.0
    %194 = vmatpush1.msra.mxu0 0.0
    %195 = vmatprep.subr.mxu0 0.0
    %196 = vmatpush1.msra.mxu0 0.0
    %197 = vmatprep.subr.mxu0 0.0
    %198 = vmatpush1.msra.mxu0 0.0
    %199 = vmatprep.subr.mxu0 0.0
    %200 = vmatpush1.msra.mxu0 0.0
    %201 = vmatprep.subr.mxu0 0.0
    %202 = vmatpush1.msra.mxu0 0.0
    %203 = vmatprep.subr.mxu0 0.0
    %204 = vmatpush1.msra.mxu0 0.0
    %205 = vmatprep.subr.mxu0 0.0
    %206 = vmatpush1.msra.mxu0 0.0
    %207 = vmatprep.subr.mxu0 0.0
    %208 = vmatpush1.msra.mxu0 0.0
    %209 = vmatprep.subr.mxu0 0.0
    %210 = vmatpush1.msra.mxu0 0.0
    %211 = vmatprep.subr.mxu0 0.0
    %212 = vmatpush1.msra.mxu0 0.0
    %213 = vmatprep.subr.mxu0 0.0
    %214 = vmatpush1.msra.mxu0 0.0
    %215 = vmatprep.subr.mxu0 0.0
    %216 = vmatpush1.msra.mxu0 0.0
    %217 = vmatprep.subr.mxu0 0.0
    %218 = vmatpush1.msra.mxu0 0.0
    %219 = vmatprep.subr.mxu0 0.0
    %220 = vmatpush1.msra.mxu0 0.0
    %221 = vmatprep.subr.mxu0 0.0
    %222 = vmatpush1.msra.mxu0 0.0
    %223 = vmatprep.subr.mxu0 0.0
    %224 = vmatpush1.msra.mxu0 0.0
    %225 = vmatprep.mubr.f32.mxu0 0.0
    %226 = vmatmul.mubr.f32.gmra.mrb[0].mxu0 %v159
    %v227 = vpop.f32.mrb[0].mxu0
    %v228 = vadd.f32 %v156, %v227
    %v229 = vpop.f32.mrb[0].mxu0
    %230 = vdwg.mxu0
    %231 = vst [vmem:[#allocation8] sm:$0xff] %v228
    // Predicated region
    $region34: #{tpu_custom_call.1} parent=1 // pred_check
      _
    $region35: #{tpu_custom_call.1} parent=1 // pred_check_branch
      %233 = sbr.rel (0) target = $region37
    $region36: #{tpu_custom_call.1} parent=1 // pred_region
      %s235 = ssub.s32 128, 128
      %236 = vsyncadd [#allocation4], %s235
      %s238 = sshll.u32 [#allocation8], 4
      %s239 = int_to_ptr.vmem [resolvable:$true] %s238
      %241 = dma.vmem_to_hbm [thread:$0]  %s239, 128, %s5, [#allocation4]
    $region37: #{tpu_custom_call.1} parent=1 // pred_fallthru
      _
    // Predicated region
    $region38: #{tpu_custom_call.1} parent=1 // pred_check
      _
    $region39: #{tpu_custom_call.1} parent=1 // pred_check_branch
      %243 = sbr.rel (0) target = $region41
    $region40: #{tpu_custom_call.1} parent=1 // pred_region
      %244 = dma.done [#allocation4], 128
    $region41: #{tpu_custom_call.1} parent=1 // pred_fallthru
      _
    %245 = vsyncpa [#allocation3], 1
    %246 = vsyncpa [#allocation6], 1
    %247 = vsyncpa [#allocation4], 1

</llo_original>
